<compile_context>
chip_gen: v5e
topology: v5e:2x2
jax: 0.10.0
libtpu: 0.0.40
codegen_flags: <defaults>
</compile_context>

<pallas_src>
import numpy as np
import jax
import jax.numpy as jnp
from jax.experimental import pallas as pl
from jax.experimental.pallas import tpu as pltpu


def _backproject_kernel(invk_ref, depth_ref, out_ref):
    # invk_ref:  (B, 9)  f32 in SMEM (scalar prefetch) -- inv_K[:, :3, :3] row-major
    # depth_ref: (1, 1, TH, W) f32 VMEM block
    # out_ref:   (1, 4, TH, W) f32 VMEM block
    b = pl.program_id(0)   # batch index
    r = pl.program_id(1)   # row-tile index
    _, _, th, w = depth_ref.shape

    # Pixel coordinates generated in-kernel (x varies along lanes, y along sublanes).
    xi = jax.lax.broadcasted_iota(jnp.int32, (th, w), 1)
    yi = jax.lax.broadcasted_iota(jnp.int32, (th, w), 0) + r * th
    x = xi.astype(jnp.float32)
    y = yi.astype(jnp.float32)

    # 3x3 inverse-intrinsics as 9 SMEM scalars -> VPU FMAs (no MXU).
    k00 = invk_ref[b, 0]; k01 = invk_ref[b, 1]; k02 = invk_ref[b, 2]
    k10 = invk_ref[b, 3]; k11 = invk_ref[b, 4]; k12 = invk_ref[b, 5]
    k20 = invk_ref[b, 6]; k21 = invk_ref[b, 7]; k22 = invk_ref[b, 8]

    d = depth_ref[0, 0]    # (TH, W)

    out_ref[0, 0] = d * (k00 * x + k01 * y + k02)
    out_ref[0, 1] = d * (k10 * x + k11 * y + k12)
    out_ref[0, 2] = d * (k20 * x + k21 * y + k22)
    out_ref[0, 3] = jnp.ones_like(d)


def _pick_row_tile(height, width, target_elems=32768):
    """Rows per spatial tile: a multiple of 8 that divides H (or the full H)."""
    if height % 8 != 0:
        return height
    th = min(height, max(8, (target_elems // max(width, 1)) // 8 * 8))
    while th > 8 and height % th != 0:
        th -= 8
    return th if height % th == 0 else height


def backproject_depth(depth, inv_K, height, width):
    """depth: (B, 1, H, W) f32, inv_K: (B, 4, 4) f32 -> (B, 4, H, W) f32."""
    B = depth.shape[0]
    assert depth.shape == (B, 1, height, width)

    th = _pick_row_tile(height, width)
    n_row_tiles = height // th

    depth_f32 = depth.astype(jnp.float32)
    invk_flat = inv_K[:, :3, :3].reshape(B, 9).astype(jnp.float32)

    cost = pl.CostEstimate(
        flops=15 * B * height * width,
        transcendentals=0,
        bytes_accessed=B * height * width * 4 * (1 + 4) + B * 9 * 4,
    )

    out = pl.pallas_call(
        _backproject_kernel,
        out_shape=jax.ShapeDtypeStruct((B, 4, height, width), jnp.float32),
        grid_spec=pltpu.PrefetchScalarGridSpec(
            num_scalar_prefetch=1,
            grid=(B, n_row_tiles),
            in_specs=[
                pl.BlockSpec((1, 1, th, width), lambda b, r, invk: (b, 0, r, 0)),
            ],
            out_specs=pl.BlockSpec((1, 4, th, width), lambda b, r, invk: (b, 0, r, 0)),
        ),
        compiler_params=pltpu.CompilerParams(
            dimension_semantics=("parallel", "parallel")),
        cost_estimate=cost,
    )(invk_flat, depth_f32)

    return out


def _reference(depth, inv_K, height, width):
    """Pure-JAX reference reproducing the PyTorch forward."""
    B = depth.shape[0]
    HW = height * width
    xs, ys = np.meshgrid(range(width), range(height), indexing="xy")
    pix = np.stack([xs.reshape(-1), ys.reshape(-1), np.ones(HW)], 0).astype(np.float32)
    pix = jnp.broadcast_to(jnp.asarray(pix), (B, 3, HW))
    cam = jnp.matmul(inv_K[:, :3, :3], pix)
    cam = depth.reshape(B, 1, HW) * cam
    ones = jnp.ones((B, 1, HW), jnp.float32)
    return jnp.concatenate([cam, ones], axis=1).reshape(B, 4, height, width)


if __name__ == "__main__":
    # TODO(synk): the torch module's debug print() calls are intentionally omitted.
    B, H, W = 2, 16, 16
    key = jax.random.PRNGKey(0)
    k_depth, k_invk = jax.random.split(key)

    depth = jax.random.uniform(k_depth, (B, 1, H, W), jnp.float32, 0.5, 10.0)

    # deterministic plausible inverse-intrinsics matrices (4x4 per batch)
    fx, fy, cx, cy = 0.58 * W, 1.92 * H, 0.5 * W, 0.5 * H
    K = np.eye(4, dtype=np.float32)
    K[0, 0], K[1, 1], K[0, 2], K[1, 2] = fx, fy, cx, cy
    inv_K_np = np.linalg.inv(K).astype(np.float32)
    inv_K = jnp.broadcast_to(jnp.asarray(inv_K_np), (B, 4, 4))
    inv_K = inv_K + 0.01 * jax.random.normal(k_invk, (B, 4, 4), jnp.float32)

    out = backproject_depth(depth, inv_K, H, W)
    out = jax.block_until_ready(out)

    ref = _reference(depth, inv_K, H, W)
    assert out.shape == (B, 4, H, W)
    np.testing.assert_allclose(np.asarray(out), np.asarray(ref), rtol=1e-5, atol=1e-5)

    print("KERNEL_OK")
</pallas_src>

<mosaic_0001>
module attributes {stable_mosaic.version = 11 : i64} {
  func.func @_backproject_kernel(%arg0: i32, %arg1: i32, %arg2: memref<2x9xf32, #tpu.memory_space<smem>>, %arg3: memref<1x1x16x16xf32, #tpu.memory_space<vmem>>, %arg4: memref<1x4x16x16xf32, #tpu.memory_space<vmem>>) attributes {dimension_semantics = [#tpu.dimension_semantics<parallel>, #tpu.dimension_semantics<parallel>], iteration_bounds = array<i64: 2, 1>, scalar_prefetch = 1 : i64, scratch_operands = 0 : i64, tpu.core_type = #tpu.core_type<tc>, window_params = [{transform_indices = @transform_0, window_bounds = array<i64: 1, 1, 16, 16>}, {transform_indices = @transform_1, window_bounds = array<i64: 1, 4, 16, 16>}]} {
    %0 = tpu.iota {dimensions = array<i32: 1>} : vector<16x16xi32>
    %1 = tpu.iota {dimensions = array<i32: 0>} : vector<16x16xi32>
    %c16_i32 = arith.constant 16 : i32
    %2 = arith.muli %arg1, %c16_i32 : i32
    %3 = vector.broadcast %2 : i32 to vector<16x16xi32>
    %4 = arith.addi %1, %3 : vector<16x16xi32>
    %5 = arith.sitofp %0 : vector<16x16xi32> to vector<16x16xf32>
    %6 = arith.sitofp %4 : vector<16x16xi32> to vector<16x16xf32>
    %7 = arith.index_cast %arg0 : i32 to index
    %c0 = arith.constant 0 : index
    %8 = memref.load %arg2[%7, %c0] : memref<2x9xf32, #tpu.memory_space<smem>>
    %9 = arith.index_cast %arg0 : i32 to index
    %c1 = arith.constant 1 : index
    %10 = memref.load %arg2[%9, %c1] : memref<2x9xf32, #tpu.memory_space<smem>>
    %11 = arith.index_cast %arg0 : i32 to index
    %c2 = arith.constant 2 : index
    %12 = memref.load %arg2[%11, %c2] : memref<2x9xf32, #tpu.memory_space<smem>>
    %13 = arith.index_cast %arg0 : i32 to index
    %c3 = arith.constant 3 : index
    %14 = memref.load %arg2[%13, %c3] : memref<2x9xf32, #tpu.memory_space<smem>>
    %15 = arith.index_cast %arg0 : i32 to index
    %c4 = arith.constant 4 : index
    %16 = memref.load %arg2[%15, %c4] : memref<2x9xf32, #tpu.memory_space<smem>>
    %17 = arith.index_cast %arg0 : i32 to index
    %c5 = arith.constant 5 : index
    %18 = memref.load %arg2[%17, %c5] : memref<2x9xf32, #tpu.memory_space<smem>>
    %19 = arith.index_cast %arg0 : i32 to index
    %c6 = arith.constant 6 : index
    %20 = memref.load %arg2[%19, %c6] : memref<2x9xf32, #tpu.memory_space<smem>>
    %21 = arith.index_cast %arg0 : i32 to index
    %c7 = arith.constant 7 : index
    %22 = memref.load %arg2[%21, %c7] : memref<2x9xf32, #tpu.memory_space<smem>>
    %23 = arith.index_cast %arg0 : i32 to index
    %c8 = arith.constant 8 : index
    %24 = memref.load %arg2[%23, %c8] : memref<2x9xf32, #tpu.memory_space<smem>>
    %c0_0 = arith.constant 0 : index
    %c0_1 = arith.constant 0 : index
    %c0_2 = arith.constant 0 : index
    %c0_3 = arith.constant 0 : index
    %25 = vector.load %arg3[%c0_0, %c0_1, %c0_2, %c0_3] : memref<1x1x16x16xf32, #tpu.memory_space<vmem>>, vector<1x1x16x16xf32>
    %26 = vector.shape_cast %25 : vector<1x1x16x16xf32> to vector<16x16xf32>
    %27 = vector.broadcast %8 : f32 to vector<16x16xf32>
    %28 = arith.mulf %27, %5 : vector<16x16xf32>
    %29 = vector.broadcast %10 : f32 to vector<16x16xf32>
    %30 = arith.mulf %29, %6 : vector<16x16xf32>
    %31 = arith.addf %28, %30 : vector<16x16xf32>
    %32 = vector.broadcast %12 : f32 to vector<16x16xf32>
    %33 = arith.addf %31, %32 : vector<16x16xf32>
    %34 = arith.mulf %26, %33 : vector<16x16xf32>
    %c0_4 = arith.constant 0 : index
    %c0_5 = arith.constant 0 : index
    %c0_6 = arith.constant 0 : index
    %c0_7 = arith.constant 0 : index
    %35 = vector.load %arg4[%c0_4, %c0_5, %c0_6, %c0_7] : memref<1x4x16x16xf32, #tpu.memory_space<vmem>>, vector<1x1x16x16xf32>
    %36 = vector.shape_cast %35 : vector<1x1x16x16xf32> to vector<16x16xf32>
    %37 = vector.shape_cast %34 : vector<16x16xf32> to vector<1x1x16x16xf32>
    tpu.vector_store %arg4[%c0_4, %c0_5, %c0_6, %c0_7], %37 {strides = array<i32>} : memref<1x4x16x16xf32, #tpu.memory_space<vmem>>, vector<1x1x16x16xf32>,
    %38 = vector.broadcast %14 : f32 to vector<16x16xf32>
    %39 = arith.mulf %38, %5 : vector<16x16xf32>
    %40 = vector.broadcast %16 : f32 to vector<16x16xf32>
    %41 = arith.mulf %40, %6 : vector<16x16xf32>
    %42 = arith.addf %39, %41 : vector<16x16xf32>
    %43 = vector.broadcast %18 : f32 to vector<16x16xf32>
    %44 = arith.addf %42, %43 : vector<16x16xf32>
    %45 = arith.mulf %26, %44 : vector<16x16xf32>
    %c0_8 = arith.constant 0 : index
    %c1_9 = arith.constant 1 : index
    %c0_10 = arith.constant 0 : index
    %c0_11 = arith.constant 0 : index
    %46 = vector.load %arg4[%c0_8, %c1_9, %c0_10, %c0_11] : memref<1x4x16x16xf32, #tpu.memory_space<vmem>>, vector<1x1x16x16xf32>
    %47 = vector.shape_cast %46 : vector<1x1x16x16xf32> to vector<16x16xf32>
    %48 = vector.shape_cast %45 : vector<16x16xf32> to vector<1x1x16x16xf32>
    tpu.vector_store %arg4[%c0_8, %c1_9, %c0_10, %c0_11], %48 {strides = array<i32>} : memref<1x4x16x16xf32, #tpu.memory_space<vmem>>, vector<1x1x16x16xf32>,
    %49 = vector.broadcast %20 : f32 to vector<16x16xf32>
    %50 = arith.mulf %49, %5 : vector<16x16xf32>
    %51 = vector.broadcast %22 : f32 to vector<16x16xf32>
    %52 = arith.mulf %51, %6 : vector<16x16xf32>
    %53 = arith.addf %50, %52 : vector<16x16xf32>
    %54 = vector.broadcast %24 : f32 to vector<16x16xf32>
    %55 = arith.addf %53, %54 : vector<16x16xf32>
    %56 = arith.mulf %26, %55 : vector<16x16xf32>
    %c0_12 = arith.constant 0 : index
    %c2_13 = arith.constant 2 : index
    %c0_14 = arith.constant 0 : index
    %c0_15 = arith.constant 0 : index
    %57 = vector.load %arg4[%c0_12, %c2_13, %c0_14, %c0_15] : memref<1x4x16x16xf32, #tpu.memory_space<vmem>>, vector<1x1x16x16xf32>
    %58 = vector.shape_cast %57 : vector<1x1x16x16xf32> to vector<16x16xf32>
    %59 = vector.shape_cast %56 : vector<16x16xf32> to vector<1x1x16x16xf32>
    tpu.vector_store %arg4[%c0_12, %c2_13, %c0_14, %c0_15], %59 {strides = array<i32>} : memref<1x4x16x16xf32, #tpu.memory_space<vmem>>, vector<1x1x16x16xf32>,
    %cst = arith.constant 1.000000e+00 : f32
    %60 = vector.broadcast %cst : f32 to vector<16x16xf32>
    %c0_16 = arith.constant 0 : index
    %c3_17 = arith.constant 3 : index
    %c0_18 = arith.constant 0 : index
    %c0_19 = arith.constant 0 : index
    %61 = vector.load %arg4[%c0_16, %c3_17, %c0_18, %c0_19] : memref<1x4x16x16xf32, #tpu.memory_space<vmem>>, vector<1x1x16x16xf32>
    %62 = vector.shape_cast %61 : vector<1x1x16x16xf32> to vector<16x16xf32>
    %63 = vector.shape_cast %60 : vector<16x16xf32> to vector<1x1x16x16xf32>
    tpu.vector_store %arg4[%c0_16, %c3_17, %c0_18, %c0_19], %63 {strides = array<i32>} : memref<1x4x16x16xf32, #tpu.memory_space<vmem>>, vector<1x1x16x16xf32>,
    return
  }
  func.func @transform_0(%arg0: i32, %arg1: i32, %arg2: memref<2x9xf32, #tpu.memory_space<smem>>) -> (i32, i32, i32, i32) {
    %c0_i32 = arith.constant 0 : i32
    %c0_i32_0 = arith.constant 0 : i32
    %c0_i32_1 = arith.constant 0 : i32
    return %arg0, %c0_i32, %arg1, %c0_i32_0 : i32, i32, i32, i32
  }
  func.func @transform_1(%arg0: i32, %arg1: i32, %arg2: memref<2x9xf32, #tpu.memory_space<smem>>) -> (i32, i32, i32, i32) {
    %c0_i32 = arith.constant 0 : i32
    %c0_i32_0 = arith.constant 0 : i32
    %c0_i32_1 = arith.constant 0 : i32
    return %arg0, %c0_i32, %arg1, %c0_i32_0 : i32, i32, i32, i32
  }
}

</mosaic_0001>

<llo_original>
// kernel: tpu_custom_call.1
$region0: #{tpu_custom_call.1}
  #allocation0 [shape = 'u32[]', space=smem, size = 0x4, offset = 0x4, fixed_abs, tag = 'smem constant byte address 0x4 - core index']
  #allocation1 [shape = 'u32[72,128]{1,0:T(1,128)}', space=vmem, size = 0x9000, scoped, tag = 'internal scratch']
  #allocation2 [shape = 's32[1]{0}', space=sflag, size = 0x4, scoped, tag = 'scoped memory for tpu_custom_call.1']
  #allocation3 [shape = 'u8[1024]{0}', space=smem, size = 0x400, scoped, tag = 'prefetched SMEM operand 0']
  %s0 = inlined_call_operand.hbm [shape: f32[2,9], index: 0, kind: input, shape index: {}]
  %s1 = inlined_call_operand.hbm [shape: f32[2,1,16,16], index: 1, kind: input, shape index: {}]
  %s2 = inlined_call_operand.hbm [shape: f32[2,4,16,16], index: 2, kind: output, shape index: {}]
  %s3 = sld [smem:[#allocation0]]
  $region41: #{tpu_custom_call.1} parent=0
    _
  %s5 = ssub.s32 1, %s3
  %s6 = scalar_select 0, %s5, %s3
  %s8 = sshll.u32 %s0, 4
  %s9 = int_to_ptr.hbm [resolvable:$true] %s8
  %11 = dma.hbm_to_smem %s9, 32, [#allocation3], [#allocation2]
  %13 = dma.done [#allocation2], 32
  %14 = sfence
  $region1: #{tpu_custom_call.1} parent=0
    #allocation4 [shape = 'u8[16384]{0}', space=vmem, size = 0x4000, scoped, tag = 'input window, operand 1']
    #allocation5 [shape = 's32[2]{0}', space=sflag, size = 0x8, scoped, tag = 'scoped memory for tpu_custom_call.1']
    #allocation6 [shape = 's32[2]{0}', space=sflag, size = 0x8, scoped, tag = 'scoped memory for tpu_custom_call.1']
    #allocation7 [shape = 'u8[65536]{0}', space=vmem, size = 0x10000, scoped, tag = 'output window, operand 0']
    %15 = vsyncpa [#allocation5], 0
    %s16 = scalar_lea.sflag [#allocation5], 1
    %17 = vsyncpa %s16, 0
    %18 = vsyncpa [#allocation6], 0
    %s19 = scalar_lea.sflag [#allocation6], 1
    %20 = vsyncpa %s19, 0
    loop: start=0, step=1, limit=4
    $region2: #{tpu_custom_call.1} parent=1 // loop_pre_header
      _
    $region3: #{tpu_custom_call.1} parent=1 // loop_header
      %s22 = sphi 0, %s26
      %p23 = scmp.ge.s32.totalorder %s22, 4
      %s29 = sphi 0, %s41
      %s30 = sphi 0, %s37
      %s31 = sphi 0, %s29
      %s32 = sphi 0, %s30
      %s33 = sphi 0, %s31
      %s34 = sphi 0, %s32
      %s46 = sphi 0, %s48
      %s49 = sphi 0, %s46
      %s50 = sphi 0, %s49
      %s66 = sphi 0, %s50
      %s74 = sphi 0, %s76
      %s77 = sphi 0, %s74
      %s78 = sphi 0, %s77
      %s94 = sphi 0, %s78
    $region4: #{tpu_custom_call.1} parent=1 // loop_header_branch
      %25 = sbr.rel (%p23) target = $region8
    $region5: #{tpu_custom_call.1} parent=1 // loop_body
      %s27 = ssub.s32 %s22, 1
      %s28 = ssub.s32 %s22, 2
      %s35 = sadd.s32 1, %s30
      %p36 = scmp.ge.s32.totalorder %s35, 1
      %s37 = scalar_select %p36, 0, %s35
      %s38 = sadd.s32 1, %s29
      %s39 = scalar_select %p36, %s38, %s29
      %p40 = scmp.ge.s32.totalorder %s39, 2
      %s41 = scalar_select %p40, 0, %s39
      %s42 = ssub.s32 %s29, %s41
      %s43 = ssub.s32 %s30, %s37
      %s44 = sor.u32 %s42, %s43
      %p45 = scmp.eq.s32.totalorder %s44, 0
      %s47 = sadd.s32 %s46, 1
      %s48 = scalar_select %p45, %s46, %s47
      %p51 = pneg %p45
      %p52 = scmp.eq.s32.totalorder %s22, 1
      %p53 = por %p51, %p52
      %p54 = scmp.ne.s32.totalorder %s46, %s49
      %p55 = scmp.eq.s32.totalorder %s22, 0
      %p56 = por %p54, %p55
      %p57 = scmp.ne.s32.totalorder %s46, %s49
      %p58 = scmp.eq.s32.totalorder %s27, 1
      %p59 = por %p57, %p58
      %p60 = scmp.ne.s32.totalorder %s49, %s50
      %p61 = scmp.eq.s32.totalorder %s27, 0
      %p62 = por %p60, %p61
      %p63 = scmp.ne.s32.totalorder %s49, %s50
      %p64 = scmp.eq.s32.totalorder %s28, 1
      %p65 = por %p63, %p64
      %p67 = scmp.ne.s32.totalorder %s50, %s66
      %p68 = scmp.eq.s32.totalorder %s28, 0
      %p69 = por %p67, %p68
      %s70 = ssub.s32 %s29, %s41
      %s71 = ssub.s32 %s30, %s37
      %s72 = sor.u32 %s70, %s71
      %p73 = scmp.eq.s32.totalorder %s72, 0
      %s75 = sadd.s32 %s74, 1
      %s76 = scalar_select %p73, %s74, %s75
      %p79 = pneg %p73
      %p80 = scmp.eq.s32.totalorder %s22, 1
      %p81 = por %p79, %p80
      %p82 = scmp.ne.s32.totalorder %s74, %s77
      %p83 = scmp.eq.s32.totalorder %s22, 0
      %p84 = por %p82, %p83
      %p85 = scmp.ne.s32.totalorder %s74, %s77
      %p86 = scmp.eq.s32.totalorder %s27, 1
      %p87 = por %p85, %p86
      %p88 = scmp.ne.s32.totalorder %s77, %s78
      %p89 = scmp.eq.s32.totalorder %s27, 0
      %p90 = por %p88, %p89
      %p91 = scmp.ne.s32.totalorder %s77, %s78
      %p92 = scmp.eq.s32.totalorder %s28, 1
      %p93 = por %p91, %p92
      %p95 = scmp.ne.s32.totalorder %s78, %s94
      %p96 = scmp.eq.s32.totalorder %s28, 0
      %p97 = por %p95, %p96
      %p98 = scmp.le.s32.totalorder 1, %s22
      %p99 = scmp.lt.s32.totalorder %s22, 3
      %p100 = pnand %p98, %p99
      %p101 = pneg %p100
      // Predicated region
      $region9: #{tpu_custom_call.1} parent=5 // pred_check
        _
      $region10: #{tpu_custom_call.1} parent=5 // pred_check_branch
        %103 = sbr.rel (%p100) target = $region12
      $region11: #{tpu_custom_call.1} parent=5 // pred_region
        %s104 = ssub.s32 %s22, 1
      $region12: #{tpu_custom_call.1} parent=5 // pred_fallthru
        _
      %p105 = scmp.lt.s32.totalorder %s22, 2
      // Predicated region
      $region13: #{tpu_custom_call.1} parent=5 // pred_check
        %p106 = pneg %p105
      $region14: #{tpu_custom_call.1} parent=5 // pred_check_branch
        %108 = sbr.rel (%p106) target = $region16
      $region15: #{tpu_custom_call.1} parent=5 // pred_region
        // Predicated region
        $region17: #{tpu_custom_call.1} parent=15 // pred_check
          %p109 = pneg %p56
        $region18: #{tpu_custom_call.1} parent=15 // pred_check_branch
          %111 = sbr.rel (%p109) target = $region20
        $region19: #{tpu_custom_call.1} parent=15 // pred_region
          %s112 = sand.u32 %s46, 1
          %s113 = scalar_lea.sflag [#allocation5], %s112
          %s114 = sand.u32 %s46, 1
          %s115 = smul.addr %s114, 16
          %s116 = scalar_lea.vmem [#allocation4], %s115
          %s117 = smul.u32 2, %s30
          %119 = vsyncadd %s113, 0
          %s120 = smul.addr %s29, 2
          %s121 = sadd.s32 %s117, %s120
          %s122 = smul.addr %s121, 8
          %s123 = scalar_lea.hbm %s1, %s122
          %s124 = sshll.u32 %s123, 4
          %s125 = int_to_ptr.hbm [resolvable:$true] %s124
          %s126 = sshll.u32 %s116, 4
          %s127 = int_to_ptr.vmem [resolvable:$true] %s126
          %132 = dma.hbm_to_vmem [thread:$0]  %s125, 256, %s127, %s113, 128, 128, 8
        $region20: #{tpu_custom_call.1} parent=15 // pred_fallthru
          _
      $region16: #{tpu_custom_call.1} parent=5 // pred_fallthru
        _
      %p133 = scmp.le.s32.totalorder 1, %s22
      %p134 = scmp.lt.s32.totalorder %s22, 3
      %p135 = pnand %p133, %p134
      %p136 = pneg %p135
      // Predicated region
      $region21: #{tpu_custom_call.1} parent=5 // pred_check
        _
      $region22: #{tpu_custom_call.1} parent=5 // pred_check_branch
        %138 = sbr.rel (%p135) target = $region24
      $region23: #{tpu_custom_call.1} parent=5 // pred_region
        %s139 = ssub.s32 %s22, 1
        %s140 = sand.u32 %s49, 1
        %s141 = scalar_lea.sflag [#allocation5], %s140
        %s142 = sand.u32 %s49, 1
        %s143 = smul.addr %s142, 16
        %s144 = scalar_lea.vmem [#allocation4], %s143
        // Predicated region
        $region25: #{tpu_custom_call.1} parent=23 // pred_check
          %p145 = pneg %p62
        $region26: #{tpu_custom_call.1} parent=23 // pred_check_branch
          %147 = sbr.rel (%p145) target = $region28
        $region27: #{tpu_custom_call.1} parent=23 // pred_region
          %149 = dma.done %s141, 256
        $region28: #{tpu_custom_call.1} parent=23 // pred_fallthru
          _
        %s150 = sand.u32 %s49, 1
        %s151 = scalar_lea.sflag [#allocation5], %s150
        %s152 = sand.u32 %s49, 1
        %s153 = smul.addr %s152, 16
        %s154 = scalar_lea.vmem [#allocation4], %s153
        %p155 = pneg %p62
        %p156 = pneg %p59
        %p157 = pneg %p90
        %p158 = pneg %p87
        %s159 = sand.u32 %s77, 1
        %s160 = scalar_lea.sflag [#allocation6], %s159
        %s161 = sand.u32 %s77, 1
        %s162 = smul.addr %s161, 64
        %s163 = scalar_lea.vmem [#allocation7], %s162
        %s164 = smul.u32 2, %s32
        %s165 = smul.u32 2, %s32
        %v166 = vlaneseq
        %v167 = vand.u32 %v166, 127
        %v168 = vlaneseq
        %v169 = vshrl.u32 %v168, 7
        %v170 = vadd.s32 %v169, 8
        %s171 = smul.u32 %s32, 16
        %v172 = vstv %s171
        %v173 = vadd.s32 %v169, %v172
        %v174 = vadd.s32 %v170, %v172
        %v175 = vcvt.s32.f32 %v167
        %v176 = vcvt.s32.f32 %v173
        %v177 = vcvt.s32.f32 %v174
        %s178 = smul.u32 %s31, 128
        %s179 = sld [smem:[#allocation3 + %s178]]
        %s180 = sadd.s32 %s178, 1
        %s181 = sld [smem:[#allocation3 + %s180]]
        %s182 = sadd.s32 %s178, 2
        %s183 = sld [smem:[#allocation3 + %s182]]
        %s184 = sadd.s32 %s178, 3
        %s185 = sld [smem:[#allocation3 + %s184]]
        %s186 = sadd.s32 %s178, 4
        %s187 = sld [smem:[#allocation3 + %s186]]
        %s188 = sadd.s32 %s178, 5
        %s189 = sld [smem:[#allocation3 + %s188]]
        %s190 = sadd.s32 %s178, 6
        %s191 = sld [smem:[#allocation3 + %s190]]
        %s192 = sadd.s32 %s178, 7
        %s193 = sld [smem:[#allocation3 + %s192]]
        %s194 = sadd.s32 %s178, 8
        %s195 = sld [smem:[#allocation3 + %s194]]
        %v196 = vld [vmem:[%s144] sm:$0xff]
        %v197 = vld [vmem:[%s144 + $0x8] sm:$0xff]
        %v198 = vstv %s179
        %v199 = vmul.f32 %v198, %v175
        %v200 = vstv %s181
        %v201 = vmul.f32 %v200, %v176
        %v202 = vmul.f32 %v200, %v177
        %v203 = vadd.f32 %v199, %v201
        %v204 = vadd.f32 %v199, %v202
        %v205 = vstv %s183
        %v206 = vadd.f32 %v203, %v205
        %v207 = vadd.f32 %v204, %v205
        %v208 = vmul.f32 %v196, %v206
        %v209 = vmul.f32 %v197, %v207
        %vm210 = vcmask 130048
        %211 = vst.msk [vmem:[%s163] sm:$0xff] %vm210, %v208
        %212 = vst.msk [vmem:[%s163 + $0x8] sm:$0xff] %vm210, %v209
        %v213 = vstv %s185
        %v214 = vmul.f32 %v213, %v175
        %v215 = vstv %s187
        %v216 = vmul.f32 %v215, %v176
        %v217 = vmul.f32 %v215, %v177
        %v218 = vadd.f32 %v214, %v216
        %v219 = vadd.f32 %v214, %v217
        %v220 = vstv %s189
        %v221 = vadd.f32 %v218, %v220
        %v222 = vadd.f32 %v219, %v220
        %v223 = vmul.f32 %v196, %v221
        %v224 = vmul.f32 %v197, %v222
        %s225 = scalar_lea.vmem %s163, 16 [#allocation7]
        %226 = vst.msk [vmem:[%s225] sm:$0xff] %vm210, %v223
        %227 = vst.msk [vmem:[%s225 + $0x8] sm:$0xff] %vm210, %v224
        %v228 = vstv %s191
        %v229 = vmul.f32 %v228, %v175
        %v230 = vstv %s193
        %v231 = vmul.f32 %v230, %v176
        %v232 = vmul.f32 %v230, %v177
        %v233 = vadd.f32 %v229, %v231
        %v234 = vadd.f32 %v229, %v232
        %v235 = vstv %s195
        %v236 = vadd.f32 %v233, %v235
        %v237 = vadd.f32 %v234, %v235
        %v238 = vmul.f32 %v196, %v236
        %v239 = vmul.f32 %v197, %v237
        %s240 = scalar_lea.vmem %s163, 32 [#allocation7]
        %241 = vst.msk [vmem:[%s240] sm:$0xff] %vm210, %v238
        %242 = vst.msk [vmem:[%s240 + $0x8] sm:$0xff] %vm210, %v239
        %s243 = scalar_lea.vmem %s163, 48 [#allocation7]
        %244 = vst.msk [vmem:[%s243] sm:$0xff] %vm210, 1.0
        %245 = vst.msk [vmem:[%s243 + $0x8] sm:$0xff] %vm210, 1.0
        %s246 = sand.u32 %s77, 1
        %s247 = scalar_lea.sflag [#allocation6], %s246
        %s248 = sand.u32 %s77, 1
        %s249 = smul.addr %s248, 64
        %s250 = scalar_lea.vmem [#allocation7], %s249
        // Predicated region
        $region29: #{tpu_custom_call.1} parent=23 // pred_check
          %p251 = pneg %p87
        $region30: #{tpu_custom_call.1} parent=23 // pred_check_branch
          %253 = sbr.rel (%p251) target = $region32
        $region31: #{tpu_custom_call.1} parent=23 // pred_region
          %s254 = smul.u32 2, %s32
          %256 = vsyncadd %s247, 0
          %s257 = smul.addr %s31, 8
          %s258 = sadd.s32 %s254, %s257
          %s259 = smul.addr %s258, 8
          %s260 = scalar_lea.hbm %s2, %s259
          %s261 = sshll.u32 %s250, 4
          %s262 = int_to_ptr.vmem [resolvable:$true] %s261
          %s263 = sshll.u32 %s260, 4
          %s264 = int_to_ptr.hbm [resolvable:$true] %s263
          %269 = dma.vmem_to_hbm [thread:$0]  %s262, 1024, %s264, %s247, 128, 128, 8
        $region32: #{tpu_custom_call.1} parent=23 // pred_fallthru
          _
      $region24: #{tpu_custom_call.1} parent=5 // pred_fallthru
        _
      %p270 = scmp.le.s32.totalorder 2, %s22
      // Predicated region
      $region33: #{tpu_custom_call.1} parent=5 // pred_check
        %p271 = pneg %p270
      $region34: #{tpu_custom_call.1} parent=5 // pred_check_branch
        %273 = sbr.rel (%p271) target = $region36
      $region35: #{tpu_custom_call.1} parent=5 // pred_region
        %s274 = ssub.s32 %s22, 2
        // Predicated region
        $region37: #{tpu_custom_call.1} parent=35 // pred_check
          %p275 = pneg %p93
        $region38: #{tpu_custom_call.1} parent=35 // pred_check_branch
          %277 = sbr.rel (%p275) target = $region40
        $region39: #{tpu_custom_call.1} parent=35 // pred_region
          %s278 = sand.u32 %s78, 1
          %s279 = scalar_lea.sflag [#allocation6], %s278
          %s280 = sand.u32 %s78, 1
          %s281 = smul.addr %s280, 64
          %s282 = scalar_lea.vmem [#allocation7], %s281
          %284 = dma.done %s279, 1024
        $region40: #{tpu_custom_call.1} parent=35 // pred_fallthru
          _
      $region36: #{tpu_custom_call.1} parent=5 // pred_fallthru
        _
    $region6: #{tpu_custom_call.1} parent=1 // loop_footer
      %s26 = sadd.s32 1, %s22
    $region7: #{tpu_custom_call.1} parent=1 // loop_footer_branch
      %21 = sbr.rel target = $region3
    $region8: #{tpu_custom_call.1} parent=1 // loop_exit
      _
    %285 = vsyncpa [#allocation5], 1
    %s286 = scalar_lea.sflag [#allocation5], 1
    %287 = vsyncpa %s286, 1
    %288 = vsyncpa [#allocation6], 1
    %s289 = scalar_lea.sflag [#allocation6], 1
    %290 = vsyncpa %s289, 1

</llo_original>
